<compile_context>
chip_gen: v7x
topology: tpu7x:2x2x1
jax: 0.10.0
libtpu: 0.0.40
codegen_flags: <defaults>
</compile_context>

<pallas_src>
import functools

import numpy as np
import jax
import jax.numpy as jnp
from jax import lax
from jax.experimental import pallas as pl
from jax.experimental.pallas import tpu as pltpu


def _gather_kernel(idx_ref, table_ref, out_ref, *, rows_per_step, pack, dd):
    """Gather `rows_per_step` table rows into one lane-dense output block.

    idx_ref   : (N_pad,) int32 in SMEM (scalar prefetch)
    table_ref : (V, dd) f32 VMEM-resident folded table (DMA'd from HBM once)
    out_ref   : (rows_per_step // pack, pack * dd) f32 output block
    """
    base = pl.program_id(0) * rows_per_step
    n_out_rows = rows_per_step // pack
    chunk = 8  # output rows statically unrolled per fori_loop iteration

    def body(c, carry):
        r0 = c * chunk
        for u in range(chunk):          # static unroll: scheduler sees 8*pack gathers
            r = r0 + u
            for p in range(pack):
                tok = idx_ref[base + r * pack + p]
                out_ref[pl.ds(r, 1), p * dd:(p + 1) * dd] = (
                    table_ref[pl.ds(tok, 1), :])
        return carry

    lax.fori_loop(0, n_out_rows // chunk, body, 0)


def _choose_rows_per_step(n_tokens):
    """Largest power-of-two rows/step in [16, 256] that keeps grid length >= 2."""
    r = 256
    while r > 16 and n_tokens < 2 * r:
        r //= 2
    return r


def density_matrix_embedding(indices, table, dim):
    """indices: (B, S) int; table: (V, D*D) f32 (scatter + diag clamp folded in).

    Returns (B, S, D, D) f32, identical to DensityMatrixEmbedding.forward.
    """
    B, S = indices.shape
    V, DD = table.shape
    assert DD == dim * dim
    N = B * S

    # Pack 2 matrices per output row when that makes the output lane-dense
    # (lane width a multiple of 128); otherwise one matrix per row.
    pack = 2 if (2 * DD) % 128 == 0 else 1

    rows_per_step = _choose_rows_per_step(N)
    n_pad = pl.cdiv(N, rows_per_step) * rows_per_step
    grid = (n_pad // rows_per_step,)
    out_rows_per_step = rows_per_step // pack   # always a multiple of 8

    # Indices -> SMEM via scalar prefetch.  Clamp defensively (PyTorch would
    # raise on out-of-range ids; here they map to rows 0 / V-1).
    idx = jnp.clip(indices.reshape(-1), 0, V - 1).astype(jnp.int32)
    if n_pad != N:
        idx = jnp.pad(idx, (0, n_pad - N))  # padded tokens gather row 0; sliced off below
    # 1-D SMEM arrays pad to next_pow2(4*N) bytes -- guard scalability.
    assert 4 * n_pad <= 256 * 1024, (
        "TODO(synk): for very long sequences feed indices in per-step SMEM "
        "blocks instead of scalar-prefetching the whole flattened array")

    # VMEM budget: resident table (worst-case double-buffered) + output blocks.
    table_bytes = V * DD * 4
    out_block_bytes = rows_per_step * DD * 4
    needed = 2 * table_bytes + 2 * out_block_bytes + (2 << 20)
    try:
        vmem_cap = int(pltpu.get_tpu_info().vmem_capacity_bytes)
    except Exception:
        vmem_cap = 64 * 1024 * 1024  # conservative fallback (v7x physical VMEM)
    vmem_limit = int(min(max(needed, 32 << 20), 0.75 * vmem_cap))
    if needed > vmem_limit:
        # TODO(synk): huge-vocab path (table left in HBM via memory_space=pl.ANY
        # plus a manual double-buffered make_async_copy row gather) not implemented.
        raise NotImplementedError("vocab table does not fit in VMEM")

    kernel = functools.partial(_gather_kernel, rows_per_step=rows_per_step,
                               pack=pack, dd=DD)

    out_flat = pl.pallas_call(
        kernel,
        out_shape=jax.ShapeDtypeStruct((n_pad // pack, pack * DD), jnp.float32),
        grid_spec=pltpu.PrefetchScalarGridSpec(
            num_scalar_prefetch=1,
            grid=grid,
            in_specs=[
                # Constant block index => the table is DMA'd to VMEM once and
                # stays resident for all grid steps.  (For very large V it could
                # additionally be single-buffered via pipeline_mode=pl.Buffered(1).)
                pl.BlockSpec((V, DD), lambda i, idx_ref: (0, 0)),
            ],
            out_specs=pl.BlockSpec((out_rows_per_step, pack * DD),
                                   lambda i, idx_ref: (i, 0)),
        ),
        compiler_params=pltpu.CompilerParams(
            dimension_semantics=("parallel",),   # grid >= 2 -> both TCs on v7x
            vmem_limit_bytes=vmem_limit,
        ),
    )(idx, table)

    # (n_pad//pack, pack*DD) row-major == (n_pad, D, D) row-major -> free reshape.
    out = out_flat.reshape(n_pad, dim, dim)[:N]
    return out.reshape(B, S, dim, dim)


def make_weight(vocab_size, dim, key):
    """Deterministic init mirroring DensityMatrixEmbedding._init_weights."""
    tril_size = dim * (dim + 1) // 2
    weight = jax.random.uniform(
        key, (vocab_size, tril_size), jnp.float32, minval=-0.1, maxval=0.1)
    diag_indices = np.array([i * (i + 1) // 2 + i for i in range(dim)])
    diag_vals = jnp.linspace(0.1, 1.0, dim, dtype=jnp.float32)
    weight = weight.at[:, diag_indices].set(
        jnp.broadcast_to(diag_vals, (vocab_size, dim)))
    return weight


def make_table(weight, dim):
    """Fold tril->dense scatter AND diagonal clamp into a (V, D*D) lookup table.

    Exact: both operations act per embedding row and commute with the per-token
    gather.
    """
    V = weight.shape[0]
    rows, cols = np.tril_indices(dim)          # same order as torch.tril_indices
    L = jnp.zeros((V, dim, dim), jnp.float32).at[:, rows, cols].set(weight)
    d = np.arange(dim)
    L = L.at[:, d, d].set(jnp.maximum(L[:, d, d], 1e-4))
    return L.reshape(V, dim * dim)


def _reference(indices, weight, dim):
    """Pure-JAX reference (gather -> scatter -> clamp), mirrors the torch code."""
    B, S = indices.shape
    params = jnp.take(weight, indices.reshape(-1), axis=0)      # (N, T)
    rows, cols = np.tril_indices(dim)
    L = jnp.zeros((params.shape[0], dim, dim), jnp.float32)
    L = L.at[:, rows, cols].set(params)
    d = np.arange(dim)
    L = L.at[:, d, d].set(jnp.maximum(L[:, d, d], 1e-4))
    return L.reshape(B, S, dim, dim)


if __name__ == "__main__":
    vocab_size, dim = 32, 8
    batch, seq = 4, 8          # N = 32 -> rows_per_step = 16 -> grid of 2 steps

    key = jax.random.PRNGKey(0)
    k_w, k_idx = jax.random.split(key)

    weight = make_weight(vocab_size, dim, k_w)
    table = make_table(weight, dim)            # (V, D*D), clamp folded in
    indices = jax.random.randint(k_idx, (batch, seq), 0, vocab_size,
                                 dtype=jnp.int32)

    out = density_matrix_embedding(indices, table, dim)
    out = jax.block_until_ready(out)

    ref = _reference(indices, weight, dim)
    assert out.shape == (batch, seq, dim, dim)
    np.testing.assert_allclose(np.asarray(out), np.asarray(ref),
                               atol=1e-6, rtol=1e-6)

    # TODO(synk): backward/training path (nn.Embedding gradient scatter-add) not
    # implemented; forward only, matching the requested module forward pass.
    print("KERNEL_OK")
</pallas_src>

<mosaic_0001>
module attributes {stable_mosaic.version = 11 : i64} {
  func.func @_gather_kernel(%arg0: i32, %arg1: memref<32xi32, #tpu.memory_space<smem>>, %arg2: memref<32x64xf32, #tpu.memory_space<vmem>>, %arg3: memref<8x128xf32, #tpu.memory_space<vmem>>) attributes {dimension_semantics = [#tpu.dimension_semantics<parallel>], iteration_bounds = array<i64: 2>, scalar_prefetch = 1 : i64, scratch_operands = 0 : i64, tpu.core_type = #tpu.core_type<tc>, window_params = [{pipeline_mode = #tpu.pipeline_mode<synchronous>, transform_indices = @transform_0, window_bounds = array<i64: 32, 64>}, {transform_indices = @transform_1, window_bounds = array<i64: 8, 128>}]} {
    %c16_i32 = arith.constant 16 : i32
    %0 = arith.muli %arg0, %c16_i32 : i32
    %c0_i32 = arith.constant 0 : i32
    %c8_i32 = arith.constant 8 : i32
    %1 = arith.muli %c0_i32, %c8_i32 : i32
    %c0_i32_0 = arith.constant 0 : i32
    %2 = arith.addi %1, %c0_i32_0 : i32
    %c2_i32 = arith.constant 2 : i32
    %3 = arith.muli %2, %c2_i32 : i32
    %4 = arith.addi %0, %3 : i32
    %c0_i32_1 = arith.constant 0 : i32
    %5 = arith.addi %4, %c0_i32_1 : i32
    %6 = arith.index_cast %5 : i32 to index
    %7 = memref.load %arg1[%6] : memref<32xi32, #tpu.memory_space<smem>>
    %8 = arith.index_cast %7 : i32 to index
    %c0 = arith.constant 0 : index
    %9 = vector.load %arg2[%8, %c0] : memref<32x64xf32, #tpu.memory_space<vmem>>, vector<1x64xf32>
    %10 = arith.index_cast %2 : i32 to index
    %c0_2 = arith.constant 0 : index
    %11 = vector.load %arg3[%10, %c0_2] : memref<8x128xf32, #tpu.memory_space<vmem>>, vector<1x64xf32>
    tpu.vector_store %arg3[%10, %c0_2], %9 {strides = array<i32>} : memref<8x128xf32, #tpu.memory_space<vmem>>, vector<1x64xf32>,
    %c2_i32_3 = arith.constant 2 : i32
    %12 = arith.muli %2, %c2_i32_3 : i32
    %13 = arith.addi %0, %12 : i32
    %c1_i32 = arith.constant 1 : i32
    %14 = arith.addi %13, %c1_i32 : i32
    %15 = arith.index_cast %14 : i32 to index
    %16 = memref.load %arg1[%15] : memref<32xi32, #tpu.memory_space<smem>>
    %17 = arith.index_cast %16 : i32 to index
    %c0_4 = arith.constant 0 : index
    %18 = vector.load %arg2[%17, %c0_4] : memref<32x64xf32, #tpu.memory_space<vmem>>, vector<1x64xf32>
    %19 = arith.index_cast %2 : i32 to index
    %c64 = arith.constant 64 : index
    %20 = vector.load %arg3[%19, %c64] : memref<8x128xf32, #tpu.memory_space<vmem>>, vector<1x64xf32>
    tpu.vector_store %arg3[%19, %c64], %18 {strides = array<i32>} : memref<8x128xf32, #tpu.memory_space<vmem>>, vector<1x64xf32>,
    %c1_i32_5 = arith.constant 1 : i32
    %21 = arith.addi %1, %c1_i32_5 : i32
    %c2_i32_6 = arith.constant 2 : i32
    %22 = arith.muli %21, %c2_i32_6 : i32
    %23 = arith.addi %0, %22 : i32
    %c0_i32_7 = arith.constant 0 : i32
    %24 = arith.addi %23, %c0_i32_7 : i32
    %25 = arith.index_cast %24 : i32 to index
    %26 = memref.load %arg1[%25] : memref<32xi32, #tpu.memory_space<smem>>
    %27 = arith.index_cast %26 : i32 to index
    %c0_8 = arith.constant 0 : index
    %28 = vector.load %arg2[%27, %c0_8] : memref<32x64xf32, #tpu.memory_space<vmem>>, vector<1x64xf32>
    %29 = arith.index_cast %21 : i32 to index
    %c0_9 = arith.constant 0 : index
    %30 = vector.load %arg3[%29, %c0_9] : memref<8x128xf32, #tpu.memory_space<vmem>>, vector<1x64xf32>
    tpu.vector_store %arg3[%29, %c0_9], %28 {strides = array<i32>} : memref<8x128xf32, #tpu.memory_space<vmem>>, vector<1x64xf32>,
    %c2_i32_10 = arith.constant 2 : i32
    %31 = arith.muli %21, %c2_i32_10 : i32
    %32 = arith.addi %0, %31 : i32
    %c1_i32_11 = arith.constant 1 : i32
    %33 = arith.addi %32, %c1_i32_11 : i32
    %34 = arith.index_cast %33 : i32 to index
    %35 = memref.load %arg1[%34] : memref<32xi32, #tpu.memory_space<smem>>
    %36 = arith.index_cast %35 : i32 to index
    %c0_12 = arith.constant 0 : index
    %37 = vector.load %arg2[%36, %c0_12] : memref<32x64xf32, #tpu.memory_space<vmem>>, vector<1x64xf32>
    %38 = arith.index_cast %21 : i32 to index
    %c64_13 = arith.constant 64 : index
    %39 = vector.load %arg3[%38, %c64_13] : memref<8x128xf32, #tpu.memory_space<vmem>>, vector<1x64xf32>
    tpu.vector_store %arg3[%38, %c64_13], %37 {strides = array<i32>} : memref<8x128xf32, #tpu.memory_space<vmem>>, vector<1x64xf32>,
    %c2_i32_14 = arith.constant 2 : i32
    %40 = arith.addi %1, %c2_i32_14 : i32
    %c2_i32_15 = arith.constant 2 : i32
    %41 = arith.muli %40, %c2_i32_15 : i32
    %42 = arith.addi %0, %41 : i32
    %c0_i32_16 = arith.constant 0 : i32
    %43 = arith.addi %42, %c0_i32_16 : i32
    %44 = arith.index_cast %43 : i32 to index
    %45 = memref.load %arg1[%44] : memref<32xi32, #tpu.memory_space<smem>>
    %46 = arith.index_cast %45 : i32 to index
    %c0_17 = arith.constant 0 : index
    %47 = vector.load %arg2[%46, %c0_17] : memref<32x64xf32, #tpu.memory_space<vmem>>, vector<1x64xf32>
    %48 = arith.index_cast %40 : i32 to index
    %c0_18 = arith.constant 0 : index
    %49 = vector.load %arg3[%48, %c0_18] : memref<8x128xf32, #tpu.memory_space<vmem>>, vector<1x64xf32>
    tpu.vector_store %arg3[%48, %c0_18], %47 {strides = array<i32>} : memref<8x128xf32, #tpu.memory_space<vmem>>, vector<1x64xf32>,
    %c2_i32_19 = arith.constant 2 : i32
    %50 = arith.muli %40, %c2_i32_19 : i32
    %51 = arith.addi %0, %50 : i32
    %c1_i32_20 = arith.constant 1 : i32
    %52 = arith.addi %51, %c1_i32_20 : i32
    %53 = arith.index_cast %52 : i32 to index
    %54 = memref.load %arg1[%53] : memref<32xi32, #tpu.memory_space<smem>>
    %55 = arith.index_cast %54 : i32 to index
    %c0_21 = arith.constant 0 : index
    %56 = vector.load %arg2[%55, %c0_21] : memref<32x64xf32, #tpu.memory_space<vmem>>, vector<1x64xf32>
    %57 = arith.index_cast %40 : i32 to index
    %c64_22 = arith.constant 64 : index
    %58 = vector.load %arg3[%57, %c64_22] : memref<8x128xf32, #tpu.memory_space<vmem>>, vector<1x64xf32>
    tpu.vector_store %arg3[%57, %c64_22], %56 {strides = array<i32>} : memref<8x128xf32, #tpu.memory_space<vmem>>, vector<1x64xf32>,
    %c3_i32 = arith.constant 3 : i32
    %59 = arith.addi %1, %c3_i32 : i32
    %c2_i32_23 = arith.constant 2 : i32
    %60 = arith.muli %59, %c2_i32_23 : i32
    %61 = arith.addi %0, %60 : i32
    %c0_i32_24 = arith.constant 0 : i32
    %62 = arith.addi %61, %c0_i32_24 : i32
    %63 = arith.index_cast %62 : i32 to index
    %64 = memref.load %arg1[%63] : memref<32xi32, #tpu.memory_space<smem>>
    %65 = arith.index_cast %64 : i32 to index
    %c0_25 = arith.constant 0 : index
    %66 = vector.load %arg2[%65, %c0_25] : memref<32x64xf32, #tpu.memory_space<vmem>>, vector<1x64xf32>
    %67 = arith.index_cast %59 : i32 to index
    %c0_26 = arith.constant 0 : index
    %68 = vector.load %arg3[%67, %c0_26] : memref<8x128xf32, #tpu.memory_space<vmem>>, vector<1x64xf32>
    tpu.vector_store %arg3[%67, %c0_26], %66 {strides = array<i32>} : memref<8x128xf32, #tpu.memory_space<vmem>>, vector<1x64xf32>,
    %c2_i32_27 = arith.constant 2 : i32
    %69 = arith.muli %59, %c2_i32_27 : i32
    %70 = arith.addi %0, %69 : i32
    %c1_i32_28 = arith.constant 1 : i32
    %71 = arith.addi %70, %c1_i32_28 : i32
    %72 = arith.index_cast %71 : i32 to index
    %73 = memref.load %arg1[%72] : memref<32xi32, #tpu.memory_space<smem>>
    %74 = arith.index_cast %73 : i32 to index
    %c0_29 = arith.constant 0 : index
    %75 = vector.load %arg2[%74, %c0_29] : memref<32x64xf32, #tpu.memory_space<vmem>>, vector<1x64xf32>
    %76 = arith.index_cast %59 : i32 to index
    %c64_30 = arith.constant 64 : index
    %77 = vector.load %arg3[%76, %c64_30] : memref<8x128xf32, #tpu.memory_space<vmem>>, vector<1x64xf32>
    tpu.vector_store %arg3[%76, %c64_30], %75 {strides = array<i32>} : memref<8x128xf32, #tpu.memory_space<vmem>>, vector<1x64xf32>,
    %c4_i32 = arith.constant 4 : i32
    %78 = arith.addi %1, %c4_i32 : i32
    %c2_i32_31 = arith.constant 2 : i32
    %79 = arith.muli %78, %c2_i32_31 : i32
    %80 = arith.addi %0, %79 : i32
    %c0_i32_32 = arith.constant 0 : i32
    %81 = arith.addi %80, %c0_i32_32 : i32
    %82 = arith.index_cast %81 : i32 to index
    %83 = memref.load %arg1[%82] : memref<32xi32, #tpu.memory_space<smem>>
    %84 = arith.index_cast %83 : i32 to index
    %c0_33 = arith.constant 0 : index
    %85 = vector.load %arg2[%84, %c0_33] : memref<32x64xf32, #tpu.memory_space<vmem>>, vector<1x64xf32>
    %86 = arith.index_cast %78 : i32 to index
    %c0_34 = arith.constant 0 : index
    %87 = vector.load %arg3[%86, %c0_34] : memref<8x128xf32, #tpu.memory_space<vmem>>, vector<1x64xf32>
    tpu.vector_store %arg3[%86, %c0_34], %85 {strides = array<i32>} : memref<8x128xf32, #tpu.memory_space<vmem>>, vector<1x64xf32>,
    %c2_i32_35 = arith.constant 2 : i32
    %88 = arith.muli %78, %c2_i32_35 : i32
    %89 = arith.addi %0, %88 : i32
    %c1_i32_36 = arith.constant 1 : i32
    %90 = arith.addi %89, %c1_i32_36 : i32
    %91 = arith.index_cast %90 : i32 to index
    %92 = memref.load %arg1[%91] : memref<32xi32, #tpu.memory_space<smem>>
    %93 = arith.index_cast %92 : i32 to index
    %c0_37 = arith.constant 0 : index
    %94 = vector.load %arg2[%93, %c0_37] : memref<32x64xf32, #tpu.memory_space<vmem>>, vector<1x64xf32>
    %95 = arith.index_cast %78 : i32 to index
    %c64_38 = arith.constant 64 : index
    %96 = vector.load %arg3[%95, %c64_38] : memref<8x128xf32, #tpu.memory_space<vmem>>, vector<1x64xf32>
    tpu.vector_store %arg3[%95, %c64_38], %94 {strides = array<i32>} : memref<8x128xf32, #tpu.memory_space<vmem>>, vector<1x64xf32>,
    %c5_i32 = arith.constant 5 : i32
    %97 = arith.addi %1, %c5_i32 : i32
    %c2_i32_39 = arith.constant 2 : i32
    %98 = arith.muli %97, %c2_i32_39 : i32
    %99 = arith.addi %0, %98 : i32
    %c0_i32_40 = arith.constant 0 : i32
    %100 = arith.addi %99, %c0_i32_40 : i32
    %101 = arith.index_cast %100 : i32 to index
    %102 = memref.load %arg1[%101] : memref<32xi32, #tpu.memory_space<smem>>
    %103 = arith.index_cast %102 : i32 to index
    %c0_41 = arith.constant 0 : index
    %104 = vector.load %arg2[%103, %c0_41] : memref<32x64xf32, #tpu.memory_space<vmem>>, vector<1x64xf32>
    %105 = arith.index_cast %97 : i32 to index
    %c0_42 = arith.constant 0 : index
    %106 = vector.load %arg3[%105, %c0_42] : memref<8x128xf32, #tpu.memory_space<vmem>>, vector<1x64xf32>
    tpu.vector_store %arg3[%105, %c0_42], %104 {strides = array<i32>} : memref<8x128xf32, #tpu.memory_space<vmem>>, vector<1x64xf32>,
    %c2_i32_43 = arith.constant 2 : i32
    %107 = arith.muli %97, %c2_i32_43 : i32
    %108 = arith.addi %0, %107 : i32
    %c1_i32_44 = arith.constant 1 : i32
    %109 = arith.addi %108, %c1_i32_44 : i32
    %110 = arith.index_cast %109 : i32 to index
    %111 = memref.load %arg1[%110] : memref<32xi32, #tpu.memory_space<smem>>
    %112 = arith.index_cast %111 : i32 to index
    %c0_45 = arith.constant 0 : index
    %113 = vector.load %arg2[%112, %c0_45] : memref<32x64xf32, #tpu.memory_space<vmem>>, vector<1x64xf32>
    %114 = arith.index_cast %97 : i32 to index
    %c64_46 = arith.constant 64 : index
    %115 = vector.load %arg3[%114, %c64_46] : memref<8x128xf32, #tpu.memory_space<vmem>>, vector<1x64xf32>
    tpu.vector_store %arg3[%114, %c64_46], %113 {strides = array<i32>} : memref<8x128xf32, #tpu.memory_space<vmem>>, vector<1x64xf32>,
    %c6_i32 = arith.constant 6 : i32
    %116 = arith.addi %1, %c6_i32 : i32
    %c2_i32_47 = arith.constant 2 : i32
    %117 = arith.muli %116, %c2_i32_47 : i32
    %118 = arith.addi %0, %117 : i32
    %c0_i32_48 = arith.constant 0 : i32
    %119 = arith.addi %118, %c0_i32_48 : i32
    %120 = arith.index_cast %119 : i32 to index
    %121 = memref.load %arg1[%120] : memref<32xi32, #tpu.memory_space<smem>>
    %122 = arith.index_cast %121 : i32 to index
    %c0_49 = arith.constant 0 : index
    %123 = vector.load %arg2[%122, %c0_49] : memref<32x64xf32, #tpu.memory_space<vmem>>, vector<1x64xf32>
    %124 = arith.index_cast %116 : i32 to index
    %c0_50 = arith.constant 0 : index
    %125 = vector.load %arg3[%124, %c0_50] : memref<8x128xf32, #tpu.memory_space<vmem>>, vector<1x64xf32>
    tpu.vector_store %arg3[%124, %c0_50], %123 {strides = array<i32>} : memref<8x128xf32, #tpu.memory_space<vmem>>, vector<1x64xf32>,
    %c2_i32_51 = arith.constant 2 : i32
    %126 = arith.muli %116, %c2_i32_51 : i32
    %127 = arith.addi %0, %126 : i32
    %c1_i32_52 = arith.constant 1 : i32
    %128 = arith.addi %127, %c1_i32_52 : i32
    %129 = arith.index_cast %128 : i32 to index
    %130 = memref.load %arg1[%129] : memref<32xi32, #tpu.memory_space<smem>>
    %131 = arith.index_cast %130 : i32 to index
    %c0_53 = arith.constant 0 : index
    %132 = vector.load %arg2[%131, %c0_53] : memref<32x64xf32, #tpu.memory_space<vmem>>, vector<1x64xf32>
    %133 = arith.index_cast %116 : i32 to index
    %c64_54 = arith.constant 64 : index
    %134 = vector.load %arg3[%133, %c64_54] : memref<8x128xf32, #tpu.memory_space<vmem>>, vector<1x64xf32>
    tpu.vector_store %arg3[%133, %c64_54], %132 {strides = array<i32>} : memref<8x128xf32, #tpu.memory_space<vmem>>, vector<1x64xf32>,
    %c7_i32 = arith.constant 7 : i32
    %135 = arith.addi %1, %c7_i32 : i32
    %c2_i32_55 = arith.constant 2 : i32
    %136 = arith.muli %135, %c2_i32_55 : i32
    %137 = arith.addi %0, %136 : i32
    %c0_i32_56 = arith.constant 0 : i32
    %138 = arith.addi %137, %c0_i32_56 : i32
    %139 = arith.index_cast %138 : i32 to index
    %140 = memref.load %arg1[%139] : memref<32xi32, #tpu.memory_space<smem>>
    %141 = arith.index_cast %140 : i32 to index
    %c0_57 = arith.constant 0 : index
    %142 = vector.load %arg2[%141, %c0_57] : memref<32x64xf32, #tpu.memory_space<vmem>>, vector<1x64xf32>
    %143 = arith.index_cast %135 : i32 to index
    %c0_58 = arith.constant 0 : index
    %144 = vector.load %arg3[%143, %c0_58] : memref<8x128xf32, #tpu.memory_space<vmem>>, vector<1x64xf32>
    tpu.vector_store %arg3[%143, %c0_58], %142 {strides = array<i32>} : memref<8x128xf32, #tpu.memory_space<vmem>>, vector<1x64xf32>,
    %c2_i32_59 = arith.constant 2 : i32
    %145 = arith.muli %135, %c2_i32_59 : i32
    %146 = arith.addi %0, %145 : i32
    %c1_i32_60 = arith.constant 1 : i32
    %147 = arith.addi %146, %c1_i32_60 : i32
    %148 = arith.index_cast %147 : i32 to index
    %149 = memref.load %arg1[%148] : memref<32xi32, #tpu.memory_space<smem>>
    %150 = arith.index_cast %149 : i32 to index
    %c0_61 = arith.constant 0 : index
    %151 = vector.load %arg2[%150, %c0_61] : memref<32x64xf32, #tpu.memory_space<vmem>>, vector<1x64xf32>
    %152 = arith.index_cast %135 : i32 to index
    %c64_62 = arith.constant 64 : index
    %153 = vector.load %arg3[%152, %c64_62] : memref<8x128xf32, #tpu.memory_space<vmem>>, vector<1x64xf32>
    tpu.vector_store %arg3[%152, %c64_62], %151 {strides = array<i32>} : memref<8x128xf32, #tpu.memory_space<vmem>>, vector<1x64xf32>,
    %c1_i32_63 = arith.constant 1 : i32
    return
  }
  func.func @transform_0(%arg0: i32, %arg1: memref<32xi32, #tpu.memory_space<smem>>) -> (i32, i32) {
    %c0_i32 = arith.constant 0 : i32
    %c0_i32_0 = arith.constant 0 : i32
    %c0_i32_1 = arith.constant 0 : i32
    return %c0_i32, %c0_i32_0 : i32, i32
  }
  func.func @transform_1(%arg0: i32, %arg1: memref<32xi32, #tpu.memory_space<smem>>) -> (i32, i32) {
    %c0_i32 = arith.constant 0 : i32
    %c0_i32_0 = arith.constant 0 : i32
    return %arg0, %c0_i32 : i32, i32
  }
}

</mosaic_0001>

<llo_original>
// kernel: tpu_custom_call.1
$region0: #{tpu_custom_call.1}
  #allocation0 [shape = 'u32[]', space=smem, size = 0x4, offset = 0x4, fixed_abs, tag = 'smem constant byte address 0x4 - core index']
  #allocation1 [shape = 'u32[144,128]{1,0:T(1,128)}', space=vmem, size = 0x12000, scoped, tag = 'internal scratch']
  #allocation2 [shape = 's32[1]{0}', space=sflag, size = 0x4, scoped, tag = 'scoped memory for tpu_custom_call.1']
  #allocation3 [shape = 'u8[512]{0}', space=smem, size = 0x200, scoped, tag = 'prefetched SMEM operand 0']
  %s0 = inlined_call_operand.hbm [shape: s32[32], index: 0, kind: input, shape index: {}]
  %s1 = inlined_call_operand.hbm [shape: f32[32,64], index: 1, kind: input, shape index: {}]
  %s2 = inlined_call_operand.hbm [shape: f32[16,128], index: 2, kind: output, shape index: {}]
  %s3 = sld [smem:[#allocation0]]
  $region41: #{tpu_custom_call.1} parent=0
    _
  %s5 = ssub.s32 1, %s3
  %s6 = scalar_select 0, %s5, %s3
  %8 = dma.hbm_to_smem %s0, 16, [#allocation3], [#allocation2]
  %9 = dma.done [#allocation2], 16
  %10 = sfence
  $region1: #{tpu_custom_call.1} parent=0
    #allocation4 [shape = 'u8[16384]{0}', space=vmem, size = 0x4000, scoped, tag = 'input window, operand 1, single buffered']
    #allocation5 [shape = 's32[2]{0}', space=sflag, size = 0x8, scoped, tag = 'scoped memory for tpu_custom_call.1']
    #allocation6 [shape = 's32[2]{0}', space=sflag, size = 0x8, scoped, tag = 'scoped memory for tpu_custom_call.1']
    #allocation7 [shape = 'u8[8192]{0}', space=vmem, size = 0x2000, scoped, tag = 'output window, operand 0']
    %11 = vsyncpa [#allocation5], 0
    %12 = vsyncpa [#allocation6], 0
    %s13 = scalar_lea.sflag [#allocation6], 1
    %14 = vsyncpa %s13, 0
    loop: start=0, step=1, limit=4
    $region2: #{tpu_custom_call.1} parent=1 // loop_pre_header
      _
    $region3: #{tpu_custom_call.1} parent=1 // loop_header
      %s16 = sphi 0, %s20
      %p17 = scmp.ge.s32.totalorder %s16, 4
      %s24 = sphi 0, %s24
      %s26 = sphi 0, %s24
      %s27 = sphi 0, %s26
      %s41 = sphi 0, %s27
      %s47 = sphi 0, %s49
      %s50 = sphi 0, %s47
      %s51 = sphi 0, %s50
      %s67 = sphi 0, %s51
    $region4: #{tpu_custom_call.1} parent=1 // loop_header_branch
      %19 = sbr.rel (%p17) target = $region8
    $region5: #{tpu_custom_call.1} parent=1 // loop_body
      %s21 = ssub.s32 %s16, 1
      %s22 = ssub.s32 %s16, 2
      %s23 = sadd.s32 %s16, 1
      %s25 = sadd.s32 %s24, 1
      %p28 = scmp.eq.s32.totalorder %s16, 1
      %p29 = scmp.ne.s32.totalorder %s24, %s26
      %p30 = scmp.eq.s32.totalorder %s16, 0
      %p31 = por %p29, %p30
      %p32 = scmp.ne.s32.totalorder %s24, %s26
      %p33 = scmp.eq.s32.totalorder %s21, 1
      %p34 = por %p32, %p33
      %p35 = scmp.ne.s32.totalorder %s26, %s27
      %p36 = scmp.eq.s32.totalorder %s21, 0
      %p37 = por %p35, %p36
      %p38 = scmp.ne.s32.totalorder %s26, %s27
      %p39 = scmp.eq.s32.totalorder %s22, 1
      %p40 = por %p38, %p39
      %p42 = scmp.ne.s32.totalorder %s27, %s41
      %p43 = scmp.eq.s32.totalorder %s22, 0
      %p44 = por %p42, %p43
      %s45 = ssub.s32 %s16, %s23
      %p46 = scmp.eq.s32.totalorder %s45, 0
      %s48 = sadd.s32 %s47, 1
      %s49 = scalar_select %p46, %s47, %s48
      %p52 = pneg %p46
      %p53 = scmp.eq.s32.totalorder %s16, 1
      %p54 = por %p52, %p53
      %p55 = scmp.ne.s32.totalorder %s47, %s50
      %p56 = scmp.eq.s32.totalorder %s16, 0
      %p57 = por %p55, %p56
      %p58 = scmp.ne.s32.totalorder %s47, %s50
      %p59 = scmp.eq.s32.totalorder %s21, 1
      %p60 = por %p58, %p59
      %p61 = scmp.ne.s32.totalorder %s50, %s51
      %p62 = scmp.eq.s32.totalorder %s21, 0
      %p63 = por %p61, %p62
      %p64 = scmp.ne.s32.totalorder %s50, %s51
      %p65 = scmp.eq.s32.totalorder %s22, 1
      %p66 = por %p64, %p65
      %p68 = scmp.ne.s32.totalorder %s51, %s67
      %p69 = scmp.eq.s32.totalorder %s22, 0
      %p70 = por %p68, %p69
      %p71 = scmp.le.s32.totalorder 1, %s16
      %p72 = scmp.lt.s32.totalorder %s16, 3
      %p73 = pnand %p71, %p72
      %p74 = pneg %p73
      // Predicated region
      $region9: #{tpu_custom_call.1} parent=5 // pred_check
        _
      $region10: #{tpu_custom_call.1} parent=5 // pred_check_branch
        %76 = sbr.rel (%p73) target = $region12
      $region11: #{tpu_custom_call.1} parent=5 // pred_region
        %s77 = ssub.s32 %s16, 1
        // Predicated region
        $region13: #{tpu_custom_call.1} parent=11 // pred_check
          %p78 = pneg %p37
        $region14: #{tpu_custom_call.1} parent=11 // pred_check_branch
          %80 = sbr.rel (%p78) target = $region16
        $region15: #{tpu_custom_call.1} parent=11 // pred_region
          %s82 = ssub.s32 512, 512
          %83 = vsyncadd [#allocation5], %s82
          %s84 = sshll.u32 [#allocation4], 4
          %s85 = int_to_ptr.vmem [resolvable:$true] %s84
          %90 = dma.hbm_to_vmem [thread:$0]  %s1, 512, %s85, [#allocation5], 128, 128, 8
        $region16: #{tpu_custom_call.1} parent=11 // pred_fallthru
          _
      $region12: #{tpu_custom_call.1} parent=5 // pred_fallthru
        _
      %p91 = scmp.lt.s32.totalorder %s16, 2
      // Predicated region
      $region17: #{tpu_custom_call.1} parent=5 // pred_check
        %p92 = pneg %p91
      $region18: #{tpu_custom_call.1} parent=5 // pred_check_branch
        %94 = sbr.rel (%p92) target = $region20
      $region19: #{tpu_custom_call.1} parent=5 // pred_region
        _
      $region20: #{tpu_custom_call.1} parent=5 // pred_fallthru
        _
      %p95 = scmp.le.s32.totalorder 1, %s16
      %p96 = scmp.lt.s32.totalorder %s16, 3
      %p97 = pnand %p95, %p96
      %p98 = pneg %p97
      // Predicated region
      $region21: #{tpu_custom_call.1} parent=5 // pred_check
        _
      $region22: #{tpu_custom_call.1} parent=5 // pred_check_branch
        %100 = sbr.rel (%p97) target = $region24
      $region23: #{tpu_custom_call.1} parent=5 // pred_region
        %s101 = ssub.s32 %s16, 1
        // Predicated region
        $region25: #{tpu_custom_call.1} parent=23 // pred_check
          %p102 = pneg %p37
        $region26: #{tpu_custom_call.1} parent=23 // pred_check_branch
          %104 = sbr.rel (%p102) target = $region28
        $region27: #{tpu_custom_call.1} parent=23 // pred_region
          %105 = dma.done [#allocation5], 512
        $region28: #{tpu_custom_call.1} parent=23 // pred_fallthru
          _
        %p106 = pneg %p37
        %p107 = pneg %p34
        %p108 = pneg %p63
        %p109 = pneg %p60
        %s110 = sand.u32 %s50, 1
        %s111 = scalar_lea.sflag [#allocation6], %s110
        %s112 = sand.u32 %s50, 1
        %s113 = smul.addr %s112, 8
        %s114 = scalar_lea.vmem [#allocation7], %s113
        %s115 = smul.u32 %s21, 16
        %s116 = sld [smem:[#allocation3 + %s115]]
        %s117 = scalar_lea.vmem [#allocation4], %s116
        %v118 = vld [vmem:[%s117] sm:$0x1]
        %vm119 = vcmask 516096
        %120 = vst.msk [vmem:[%s114] sm:$0x1] %vm119, %v118
        %s121 = sadd.s32 %s115, 1
        %s122 = sld [smem:[#allocation3 + %s121]]
        %s123 = scalar_lea.vmem [#allocation4], %s122
        %v124 = vld [vmem:[%s123] sm:$0x1]
        %126 = vrot.lane.b32.xlu0 %v124, 64
        %v127 = vpop.permute.xlu0 %126
        %vm129 = vcmask 1040896
        %130 = vst.msk [vmem:[%s114] sm:$0x1] %vm129, %v127
        %s131 = sadd.s32 %s115, 2
        %s132 = sld [smem:[#allocation3 + %s131]]
        %s133 = scalar_lea.vmem [#allocation4], %s132
        %v134 = vld [vmem:[%s133] sm:$0x1]
        %135 = vst.msk [vmem:[%s114 + $0x1] sm:$0x1] %vm119, %v134
        %s136 = sadd.s32 %s115, 3
        %s137 = sld [smem:[#allocation3 + %s136]]
        %s138 = scalar_lea.vmem [#allocation4], %s137
        %v139 = vld [vmem:[%s138] sm:$0x1]
        %141 = vrot.lane.b32.xlu0 %v139, 64
        %v142 = vpop.permute.xlu0 %141
        %144 = vst.msk [vmem:[%s114 + $0x1] sm:$0x1] %vm129, %v142
        %s145 = sadd.s32 %s115, 4
        %s146 = sld [smem:[#allocation3 + %s145]]
        %s147 = scalar_lea.vmem [#allocation4], %s146
        %v148 = vld [vmem:[%s147] sm:$0x1]
        %149 = vst.msk [vmem:[%s114 + $0x2] sm:$0x1] %vm119, %v148
        %s150 = sadd.s32 %s115, 5
        %s151 = sld [smem:[#allocation3 + %s150]]
        %s152 = scalar_lea.vmem [#allocation4], %s151
        %v153 = vld [vmem:[%s152] sm:$0x1]
        %155 = vrot.lane.b32.xlu0 %v153, 64
        %v156 = vpop.permute.xlu0 %155
        %158 = vst.msk [vmem:[%s114 + $0x2] sm:$0x1] %vm129, %v156
        %s159 = sadd.s32 %s115, 6
        %s160 = sld [smem:[#allocation3 + %s159]]
        %s161 = scalar_lea.vmem [#allocation4], %s160
        %v162 = vld [vmem:[%s161] sm:$0x1]
        %163 = vst.msk [vmem:[%s114 + $0x3] sm:$0x1] %vm119, %v162
        %s164 = sadd.s32 %s115, 7
        %s165 = sld [smem:[#allocation3 + %s164]]
        %s166 = scalar_lea.vmem [#allocation4], %s165
        %v167 = vld [vmem:[%s166] sm:$0x1]
        %169 = vrot.lane.b32.xlu0 %v167, 64
        %v170 = vpop.permute.xlu0 %169
        %172 = vst.msk [vmem:[%s114 + $0x3] sm:$0x1] %vm129, %v170
        %s173 = sadd.s32 %s115, 8
        %s174 = sld [smem:[#allocation3 + %s173]]
        %s175 = scalar_lea.vmem [#allocation4], %s174
        %v176 = vld [vmem:[%s175] sm:$0x1]
        %177 = vst.msk [vmem:[%s114 + $0x4] sm:$0x1] %vm119, %v176
        %s178 = sadd.s32 %s115, 9
        %s179 = sld [smem:[#allocation3 + %s178]]
        %s180 = scalar_lea.vmem [#allocation4], %s179
        %v181 = vld [vmem:[%s180] sm:$0x1]
        %183 = vrot.lane.b32.xlu0 %v181, 64
        %v184 = vpop.permute.xlu0 %183
        %186 = vst.msk [vmem:[%s114 + $0x4] sm:$0x1] %vm129, %v184
        %s187 = sadd.s32 %s115, 10
        %s188 = sld [smem:[#allocation3 + %s187]]
        %s189 = scalar_lea.vmem [#allocation4], %s188
        %v190 = vld [vmem:[%s189] sm:$0x1]
        %191 = vst.msk [vmem:[%s114 + $0x5] sm:$0x1] %vm119, %v190
        %s192 = sadd.s32 %s115, 11
        %s193 = sld [smem:[#allocation3 + %s192]]
        %s194 = scalar_lea.vmem [#allocation4], %s193
        %v195 = vld [vmem:[%s194] sm:$0x1]
        %197 = vrot.lane.b32.xlu0 %v195, 64
        %v198 = vpop.permute.xlu0 %197
        %200 = vst.msk [vmem:[%s114 + $0x5] sm:$0x1] %vm129, %v198
        %s201 = sadd.s32 %s115, 12
        %s202 = sld [smem:[#allocation3 + %s201]]
        %s203 = scalar_lea.vmem [#allocation4], %s202
        %v204 = vld [vmem:[%s203] sm:$0x1]
        %205 = vst.msk [vmem:[%s114 + $0x6] sm:$0x1] %vm119, %v204
        %s206 = sadd.s32 %s115, 13
        %s207 = sld [smem:[#allocation3 + %s206]]
        %s208 = scalar_lea.vmem [#allocation4], %s207
        %v209 = vld [vmem:[%s208] sm:$0x1]
        %211 = vrot.lane.b32.xlu0 %v209, 64
        %v212 = vpop.permute.xlu0 %211
        %214 = vst.msk [vmem:[%s114 + $0x6] sm:$0x1] %vm129, %v212
        %s215 = sadd.s32 %s115, 14
        %s216 = sld [smem:[#allocation3 + %s215]]
        %s217 = scalar_lea.vmem [#allocation4], %s216
        %v218 = vld [vmem:[%s217] sm:$0x1]
        %219 = vst.msk [vmem:[%s114 + $0x7] sm:$0x1] %vm119, %v218
        %s220 = sadd.s32 %s115, 15
        %s221 = sld [smem:[#allocation3 + %s220]]
        %s222 = scalar_lea.vmem [#allocation4], %s221
        %v223 = vld [vmem:[%s222] sm:$0x1]
        %225 = vrot.lane.b32.xlu0 %v223, 64
        %v226 = vpop.permute.xlu0 %225
        %228 = vst.msk [vmem:[%s114 + $0x7] sm:$0x1] %vm129, %v226
        %s229 = sand.u32 %s50, 1
        %s230 = scalar_lea.sflag [#allocation6], %s229
        %s231 = sand.u32 %s50, 1
        %s232 = smul.addr %s231, 8
        %s233 = scalar_lea.vmem [#allocation7], %s232
        // Predicated region
        $region29: #{tpu_custom_call.1} parent=23 // pred_check
          %p234 = pneg %p60
        $region30: #{tpu_custom_call.1} parent=23 // pred_check_branch
          %236 = sbr.rel (%p234) target = $region32
        $region31: #{tpu_custom_call.1} parent=23 // pred_region
          %s238 = ssub.s32 128, 128
          %239 = vsyncadd %s230, %s238
          %s240 = smul.addr %s21, 128
          %s241 = scalar_lea.hbm %s2, %s240
          %s243 = sshll.u32 %s233, 4
          %s244 = int_to_ptr.vmem [resolvable:$true] %s243
          %246 = dma.vmem_to_hbm [thread:$0]  %s244, 128, %s241, %s230
        $region32: #{tpu_custom_call.1} parent=23 // pred_fallthru
          _
      $region24: #{tpu_custom_call.1} parent=5 // pred_fallthru
        _
      %p247 = scmp.le.s32.totalorder 2, %s16
      // Predicated region
      $region33: #{tpu_custom_call.1} parent=5 // pred_check
        %p248 = pneg %p247
      $region34: #{tpu_custom_call.1} parent=5 // pred_check_branch
        %250 = sbr.rel (%p248) target = $region36
      $region35: #{tpu_custom_call.1} parent=5 // pred_region
        %s251 = ssub.s32 %s16, 2
        // Predicated region
        $region37: #{tpu_custom_call.1} parent=35 // pred_check
          %p252 = pneg %p66
        $region38: #{tpu_custom_call.1} parent=35 // pred_check_branch
          %254 = sbr.rel (%p252) target = $region40
        $region39: #{tpu_custom_call.1} parent=35 // pred_region
          %s255 = sand.u32 %s51, 1
          %s256 = scalar_lea.sflag [#allocation6], %s255
          %s257 = sand.u32 %s51, 1
          %s258 = smul.addr %s257, 8
          %s259 = scalar_lea.vmem [#allocation7], %s258
          %260 = dma.done %s256, 128
        $region40: #{tpu_custom_call.1} parent=35 // pred_fallthru
          _
      $region36: #{tpu_custom_call.1} parent=5 // pred_fallthru
        _
    $region6: #{tpu_custom_call.1} parent=1 // loop_footer
      %s20 = sadd.s32 1, %s16
    $region7: #{tpu_custom_call.1} parent=1 // loop_footer_branch
      %15 = sbr.rel target = $region3
    $region8: #{tpu_custom_call.1} parent=1 // loop_exit
      _
    %261 = vsyncpa [#allocation5], 1
    %s262 = scalar_lea.sflag [#allocation5], 1
    %263 = vsyncpa %s262, 1
    %264 = vsyncpa [#allocation6], 1
    %s265 = scalar_lea.sflag [#allocation6], 1
    %266 = vsyncpa %s265, 1

</llo_original>
